<compile_context>
chip_gen: v6e
topology: v6e:2x2x1
jax: 0.10.0
libtpu: 0.0.40
codegen_flags: <defaults>
</compile_context>

<pallas_src>
import functools

import jax
import jax.numpy as jnp
from jax.experimental import pallas as pl
from jax.experimental.pallas import tpu as pltpu

EPS = 1e-10
LANE = 128
TB_ALIGN = 16          # bf16 vregs pack 16 sublanes
USE_BF16_MXU = True    # bf16 operands / f32 accumulation on the a/gate matmul only


def _round_up(x, m):
    return (x + m - 1) // m * m


def _cdiv(a, b):
    return -(-a // b)


# ---------------------------------------------------------------------------
# Fused kernel: the whole n_layers NALU stack for one batch tile.
# All weight-space math (tanh/sigmoid, [W|G] concat, bf16 cast) is precomputed.
# ---------------------------------------------------------------------------
def _nalu_stack_kernel(x_ref, wg_ref, w_ref, o_ref, *, n_layers, out_cols):
    # x_ref : (TB, Dp)         f32 activations, zero-padded features
    # wg_ref: (L, Dp, 2*Dp)    bf16 precomputed [W | G] (transposed + zero-padded)
    # w_ref : (L, Dp, Dp)      f32  precomputed W for the multiplicative path
    # o_ref : (TB, Dpo)        f32, Dpo = round_up(out_dim, 128) <= Dp
    dp = w_ref.shape[-1]
    h = x_ref[...]
    for layer in range(n_layers):
        wg = wg_ref[layer]                                   # (Dp, 2*Dp) bf16
        w = w_ref[layer]                                     # (Dp, Dp)   f32

        # One MXU pass for both the additive path and the gate: x @ [W | G].
        lhs = h.astype(jnp.bfloat16) if USE_BF16_MXU else h
        rhs = wg if USE_BF16_MXU else wg.astype(jnp.float32)
        ag = jnp.dot(lhs, rhs, preferred_element_type=jnp.float32)   # (TB, 2*Dp)
        a = ag[:, :dp]
        gate = jax.nn.sigmoid(ag[:, dp:])

        # Multiplicative path, kept fully in f32 (most precision sensitive).
        log_h = jnp.log(jnp.abs(h) + EPS)
        m = jnp.exp(jnp.dot(log_h, w, preferred_element_type=jnp.float32))

        h = gate * a + (1.0 - gate) * m
    o_ref[...] = h[:, :out_cols]


# ---------------------------------------------------------------------------
# Parameter init (PyTorch layout) and one-time packing for the kernel.
# ---------------------------------------------------------------------------
def init_nalu_params(key, in_dim, hidden_dim, out_dim, n_layers):
    """Mirror kaiming_uniform_(a=sqrt(5)): bound = 1/sqrt(fan_in). PyTorch layout."""
    params = []
    for i in range(n_layers):
        d_in = hidden_dim if i > 0 else in_dim
        d_out = hidden_dim if i < n_layers - 1 else out_dim
        bound = 1.0 / float(d_in) ** 0.5
        key, kg, kw, km = jax.random.split(key, 4)
        G = jax.random.uniform(kg, (d_out, d_in), jnp.float32, -bound, bound)
        W_hat = jax.random.uniform(kw, (d_out, d_in), jnp.float32, -bound, bound)
        M_hat = jax.random.uniform(km, (d_out, d_in), jnp.float32, -bound, bound)
        params.append({"G": G, "W_hat": W_hat, "M_hat": M_hat})
    return params


def pack_nalu_params(params):
    """Precompute kernel-ready weights once per forward:
       W = tanh(W_hat)*sigmoid(M_hat); transpose (out,in)->(in,out); zero-pad to
       (Dp, Dp) with Dp = 128*k; build the fused [W | G] slab (bf16) and keep a
       separate f32 W for the multiplicative path; stack over layers."""
    dims = set()
    for p in params:
        d_out, d_in = p["W_hat"].shape
        dims.update((d_out, d_in))
    dp = _round_up(max(dims), LANE)

    wg_list, w_list = [], []
    for p in params:
        w = jnp.tanh(p["W_hat"]) * jax.nn.sigmoid(p["M_hat"])          # (out, in) f32
        d_out, d_in = w.shape
        w_t = jnp.pad(w.T, ((0, dp - d_in), (0, dp - d_out)))          # (Dp, Dp)
        g_t = jnp.pad(p["G"].T, ((0, dp - d_in), (0, dp - d_out)))     # (Dp, Dp)
        wg = jnp.concatenate([w_t, g_t], axis=1)                       # (Dp, 2*Dp)
        wg_list.append(wg.astype(jnp.bfloat16 if USE_BF16_MXU else jnp.float32))
        w_list.append(w_t)
    return {"WG": jnp.stack(wg_list), "W": jnp.stack(w_list)}


# ---------------------------------------------------------------------------
# Forward: one pallas_call for the whole stack, batch-tiled "parallel" grid.
# ---------------------------------------------------------------------------
@functools.partial(jax.jit, static_argnames=("out_dim", "block_b", "min_grid_steps"))
def nalu_forward(x, wg, w, *, out_dim, block_b=512, min_grid_steps=2):
    b, in_dim = x.shape
    n_layers, dp, _ = w.shape
    dpo = _round_up(out_dim, LANE)           # lane-dense output slab (<= dp)

    # Batch tiling: pick the tile from the step count so awkward batch sizes are
    # padded minimally; force an even number of >= 2 steps (v7x dual TensorCore);
    # align the tile to 16 sublanes for the bf16 operand path.
    steps = _round_up(max(min_grid_steps, _cdiv(b, block_b)), min_grid_steps)
    tb = _round_up(_cdiv(b, steps), TB_ALIGN)
    bp = tb * steps
    x_pad = jnp.pad(x, ((0, bp - b), (0, dp - in_dim)))

    kernel = functools.partial(_nalu_stack_kernel, n_layers=n_layers, out_cols=dpo)

    # Resident weights: constant block index -> single-buffered (no pipelining win,
    # half the weight VMEM footprint).
    wg_spec = pl.BlockSpec((n_layers, dp, 2 * dp), lambda i: (0, 0, 0),
                           pipeline_mode=pl.Buffered(buffer_count=1))
    w_spec = pl.BlockSpec((n_layers, dp, dp), lambda i: (0, 0, 0),
                          pipeline_mode=pl.Buffered(buffer_count=1))

    # VMEM budget sized to real usage, clamped to v7x's 64 MiB physical VMEM.
    # (If resident weights ever exceed that, the right fallback is tiling the
    #  output-column dim of [W|G]/W with a second "arbitrary" grid axis.)
    weight_bytes = n_layers * dp * (2 * dp) * (2 if USE_BF16_MXU else 4) \
        + n_layers * dp * dp * 4
    act_bytes = 2 * tb * dp * 4 + 2 * tb * dpo * 4          # double-buffered in/out
    temp_bytes = 12 * tb * dp * 4                            # per-layer live temps
    vmem_bytes = min(max(weight_bytes + act_bytes + temp_bytes + (4 << 20), 16 << 20),
                     64 << 20)

    cost = pl.CostEstimate(
        flops=bp * n_layers * 6 * dp * dp,                   # 2 matmuls per layer
        transcendentals=bp * n_layers * 3 * dp,              # sigmoid + log + exp
        bytes_accessed=bp * dp * 4 + bp * dpo * 4 + weight_bytes)

    out = pl.pallas_call(
        kernel,
        out_shape=jax.ShapeDtypeStruct((bp, dpo), jnp.float32),
        grid=(steps,),
        in_specs=[
            pl.BlockSpec((tb, dp), lambda i: (i, 0)),        # activations, batch-tiled
            wg_spec,                                         # resident [W|G] (bf16)
            w_spec,                                          # resident W (f32)
        ],
        out_specs=pl.BlockSpec((tb, dpo), lambda i: (i, 0)),
        compiler_params=pltpu.CompilerParams(
            dimension_semantics=("parallel",),               # shard batch across TCs
            vmem_limit_bytes=int(vmem_bytes)),
        cost_estimate=cost,
    )(x_pad, wg, w)

    return out[:b, :out_dim]


# ---------------------------------------------------------------------------
# Pure-JAX references: dtype-matched (bf16 a/gate operands) and pure f32.
# ---------------------------------------------------------------------------
def nalu_reference(x, params, *, bf16_matmul):
    h = x
    for p in params:
        w = jnp.tanh(p["W_hat"]) * jax.nn.sigmoid(p["M_hat"])      # (out, in) f32
        wt, gt = w.T, p["G"].T
        lhs, wt_d, gt_d = h, wt, gt
        if bf16_matmul:
            lhs = lhs.astype(jnp.bfloat16)
            wt_d = wt.astype(jnp.bfloat16)
            gt_d = gt.astype(jnp.bfloat16)
        a = jnp.dot(lhs, wt_d, preferred_element_type=jnp.float32)
        gate = jax.nn.sigmoid(jnp.dot(lhs, gt_d, preferred_element_type=jnp.float32))
        m = jnp.exp(jnp.dot(jnp.log(jnp.abs(h) + EPS), wt,
                            preferred_element_type=jnp.float32))
        h = gate * a + (1.0 - gate) * m
    return h


if __name__ == "__main__":
    # Small shapes consistent with NALU(in_dim, hidden_dim, out_dim, n_layers).
    batch, in_dim, hidden_dim, out_dim, n_layers = 8, 16, 32, 8, 2

    key = jax.random.PRNGKey(0)
    key, kx = jax.random.split(key)
    x = jax.random.normal(kx, (batch, in_dim), jnp.float32)

    params = init_nalu_params(key, in_dim, hidden_dim, out_dim, n_layers)
    packed = pack_nalu_params(params)   # one-time weight precompute + pad + stack

    out = nalu_forward(x, packed["WG"], packed["W"], out_dim=out_dim)
    jax.block_until_ready(out)

    assert out.shape == (batch, out_dim), out.shape
    assert bool(jnp.all(jnp.isfinite(out)))

    # Kernel vs. a reference that uses the same bf16-operand policy (tight check).
    ref_matched = nalu_reference(x, params, bf16_matmul=USE_BF16_MXU)
    assert jnp.allclose(out, ref_matched, rtol=5e-3, atol=5e-3), float(
        jnp.max(jnp.abs(out - ref_matched)))

    # Kernel vs. the true f32 module semantics (looser: bf16 MXU operands).
    ref_f32 = nalu_reference(x, params, bf16_matmul=False)
    assert jnp.allclose(out, ref_f32, rtol=5e-2, atol=5e-2), float(
        jnp.max(jnp.abs(out - ref_f32)))

    print("KERNEL_OK")
</pallas_src>

<mosaic_0001>
module attributes {stable_mosaic.version = 11 : i64} {
  func.func @_nalu_stack_kernel(%arg0: i32, %arg1: memref<16x128xf32, #tpu.memory_space<vmem>>, %arg2: memref<2x128x256xbf16, #tpu.memory_space<vmem>>, %arg3: memref<2x128x128xf32, #tpu.memory_space<vmem>>, %arg4: memref<16x128xf32, #tpu.memory_space<vmem>>) attributes {dimension_semantics = [#tpu.dimension_semantics<parallel>], iteration_bounds = array<i64: 2>, scalar_prefetch = 0 : i64, scratch_operands = 0 : i64, tpu.core_type = #tpu.core_type<tc>, window_params = [{transform_indices = @transform_0, window_bounds = array<i64: 16, 128>}, {pipeline_mode = #tpu.pipeline_mode<synchronous>, transform_indices = @transform_1, window_bounds = array<i64: 2, 128, 256>}, {pipeline_mode = #tpu.pipeline_mode<synchronous>, transform_indices = @transform_2, window_bounds = array<i64: 2, 128, 128>}, {transform_indices = @transform_3, window_bounds = array<i64: 16, 128>}]} {
    %c0 = arith.constant 0 : index
    %c0_0 = arith.constant 0 : index
    %0 = vector.load %arg1[%c0, %c0_0] : memref<16x128xf32, #tpu.memory_space<vmem>>, vector<16x128xf32>
    %c0_1 = arith.constant 0 : index
    %c0_2 = arith.constant 0 : index
    %c0_3 = arith.constant 0 : index
    %1 = vector.load %arg2[%c0_1, %c0_2, %c0_3] : memref<2x128x256xbf16, #tpu.memory_space<vmem>>, vector<1x128x256xbf16>
    %2 = vector.shape_cast %1 : vector<1x128x256xbf16> to vector<128x256xbf16>
    %c0_4 = arith.constant 0 : index
    %c0_5 = arith.constant 0 : index
    %c0_6 = arith.constant 0 : index
    %3 = vector.load %arg3[%c0_4, %c0_5, %c0_6] : memref<2x128x128xf32, #tpu.memory_space<vmem>>, vector<1x128x128xf32>
    %4 = vector.shape_cast %3 : vector<1x128x128xf32> to vector<128x128xf32>
    %5 = arith.truncf %0 : vector<16x128xf32> to vector<16x128xbf16>
    %cst = arith.constant dense<0.000000e+00> : vector<16x256xf32>
    %6 = tpu.matmul %5, %2, %cst {dimension_numbers = #tpu.dot_dimension_numbers<[1], [0], [0], [1], [0, 0, 1, 1], [], []>} : vector<16x128xbf16>, vector<128x256xbf16>, vector<16x256xf32> -> vector<16x256xf32>
    %7 = vector.extract_strided_slice %6 {offsets = [0, 0], sizes = [16, 128], strides = [1, 1]} : vector<16x256xf32> to vector<16x128xf32>
    %8 = vector.extract_strided_slice %6 {offsets = [0, 128], sizes = [16, 128], strides = [1, 1]} : vector<16x256xf32> to vector<16x128xf32>
    %9 = arith.negf %8 : vector<16x128xf32>
    %10 = math.exp %9 : vector<16x128xf32>
    %cst_7 = arith.constant 1.000000e+00 : f32
    %11 = vector.broadcast %cst_7 : f32 to vector<16x128xf32>
    %12 = arith.addf %11, %10 : vector<16x128xf32>
    %13 = arith.divf %11, %12 : vector<16x128xf32>
    %14 = math.absf %0 : vector<16x128xf32>
    %cst_8 = arith.constant 1.000000e-10 : f32
    %15 = vector.broadcast %cst_8 : f32 to vector<16x128xf32>
    %16 = arith.addf %14, %15 : vector<16x128xf32>
    %17 = math.log %16 : vector<16x128xf32>
    %cst_9 = arith.constant dense<0.000000e+00> : vector<16x128xf32>
    %18 = tpu.matmul %17, %4, %cst_9 {dimension_numbers = #tpu.dot_dimension_numbers<[1], [0], [0], [1], [0, 0, 1, 1], [], []>} : vector<16x128xf32>, vector<128x128xf32>, vector<16x128xf32> -> vector<16x128xf32>
    %19 = math.exp %18 : vector<16x128xf32>
    %20 = arith.mulf %13, %7 : vector<16x128xf32>
    %cst_10 = arith.constant 1.000000e+00 : f32
    %21 = vector.broadcast %cst_10 : f32 to vector<16x128xf32>
    %22 = arith.subf %21, %13 : vector<16x128xf32>
    %23 = arith.mulf %22, %19 : vector<16x128xf32>
    %24 = arith.addf %20, %23 : vector<16x128xf32>
    %c1 = arith.constant 1 : index
    %c0_11 = arith.constant 0 : index
    %c0_12 = arith.constant 0 : index
    %25 = vector.load %arg2[%c1, %c0_11, %c0_12] : memref<2x128x256xbf16, #tpu.memory_space<vmem>>, vector<1x128x256xbf16>
    %26 = vector.shape_cast %25 : vector<1x128x256xbf16> to vector<128x256xbf16>
    %c1_13 = arith.constant 1 : index
    %c0_14 = arith.constant 0 : index
    %c0_15 = arith.constant 0 : index
    %27 = vector.load %arg3[%c1_13, %c0_14, %c0_15] : memref<2x128x128xf32, #tpu.memory_space<vmem>>, vector<1x128x128xf32>
    %28 = vector.shape_cast %27 : vector<1x128x128xf32> to vector<128x128xf32>
    %29 = arith.truncf %24 : vector<16x128xf32> to vector<16x128xbf16>
    %cst_16 = arith.constant dense<0.000000e+00> : vector<16x256xf32>
    %30 = tpu.matmul %29, %26, %cst_16 {dimension_numbers = #tpu.dot_dimension_numbers<[1], [0], [0], [1], [0, 0, 1, 1], [], []>} : vector<16x128xbf16>, vector<128x256xbf16>, vector<16x256xf32> -> vector<16x256xf32>
    %31 = vector.extract_strided_slice %30 {offsets = [0, 0], sizes = [16, 128], strides = [1, 1]} : vector<16x256xf32> to vector<16x128xf32>
    %32 = vector.extract_strided_slice %30 {offsets = [0, 128], sizes = [16, 128], strides = [1, 1]} : vector<16x256xf32> to vector<16x128xf32>
    %33 = arith.negf %32 : vector<16x128xf32>
    %34 = math.exp %33 : vector<16x128xf32>
    %cst_17 = arith.constant 1.000000e+00 : f32
    %35 = vector.broadcast %cst_17 : f32 to vector<16x128xf32>
    %36 = arith.addf %35, %34 : vector<16x128xf32>
    %37 = arith.divf %35, %36 : vector<16x128xf32>
    %38 = math.absf %24 : vector<16x128xf32>
    %cst_18 = arith.constant 1.000000e-10 : f32
    %39 = vector.broadcast %cst_18 : f32 to vector<16x128xf32>
    %40 = arith.addf %38, %39 : vector<16x128xf32>
    %41 = math.log %40 : vector<16x128xf32>
    %cst_19 = arith.constant dense<0.000000e+00> : vector<16x128xf32>
    %42 = tpu.matmul %41, %28, %cst_19 {dimension_numbers = #tpu.dot_dimension_numbers<[1], [0], [0], [1], [0, 0, 1, 1], [], []>} : vector<16x128xf32>, vector<128x128xf32>, vector<16x128xf32> -> vector<16x128xf32>
    %43 = math.exp %42 : vector<16x128xf32>
    %44 = arith.mulf %37, %31 : vector<16x128xf32>
    %cst_20 = arith.constant 1.000000e+00 : f32
    %45 = vector.broadcast %cst_20 : f32 to vector<16x128xf32>
    %46 = arith.subf %45, %37 : vector<16x128xf32>
    %47 = arith.mulf %46, %43 : vector<16x128xf32>
    %48 = arith.addf %44, %47 : vector<16x128xf32>
    %c0_21 = arith.constant 0 : index
    %c0_22 = arith.constant 0 : index
    %49 = vector.load %arg4[%c0_21, %c0_22] : memref<16x128xf32, #tpu.memory_space<vmem>>, vector<16x128xf32>
    tpu.vector_store %arg4[%c0_21, %c0_22], %48 {strides = array<i32>} : memref<16x128xf32, #tpu.memory_space<vmem>>, vector<16x128xf32>,
    return
  }
  func.func @transform_0(%arg0: i32) -> (i32, i32) {
    %c0_i32 = arith.constant 0 : i32
    %c0_i32_0 = arith.constant 0 : i32
    return %arg0, %c0_i32 : i32, i32
  }
  func.func @transform_1(%arg0: i32) -> (i32, i32, i32) {
    %c0_i32 = arith.constant 0 : i32
    %c0_i32_0 = arith.constant 0 : i32
    %c0_i32_1 = arith.constant 0 : i32
    %c0_i32_2 = arith.constant 0 : i32
    return %c0_i32, %c0_i32_0, %c0_i32_1 : i32, i32, i32
  }
  func.func @transform_2(%arg0: i32) -> (i32, i32, i32) {
    %c0_i32 = arith.constant 0 : i32
    %c0_i32_0 = arith.constant 0 : i32
    %c0_i32_1 = arith.constant 0 : i32
    %c0_i32_2 = arith.constant 0 : i32
    return %c0_i32, %c0_i32_0, %c0_i32_1 : i32, i32, i32
  }
  func.func @transform_3(%arg0: i32) -> (i32, i32) {
    %c0_i32 = arith.constant 0 : i32
    %c0_i32_0 = arith.constant 0 : i32
    return %arg0, %c0_i32 : i32, i32
  }
}

</mosaic_0001>

<llo_original>
// kernel: nalu_forward.1
$region0: #{nalu_forward.1}
  #allocation0 [shape = 'u32[]', space=smem, size = 0x4, offset = 0x4, fixed_abs, tag = 'smem constant byte address 0x4 - core index']
  #allocation1 [shape = 'u32[144,128]{1,0:T(1,128)}', space=vmem, size = 0x12000, scoped, tag = 'internal scratch']
  %s0 = inlined_call_operand.vmem [shape: f32[32,128], index: 0, kind: input, shape index: {}]
  %s1 = inlined_call_operand.hbm [shape: bf16[2,128,256], index: 1, kind: input, shape index: {}]
  %s2 = inlined_call_operand.hbm [shape: f32[2,128,128], index: 2, kind: input, shape index: {}]
  %s3 = inlined_call_operand.vmem [shape: f32[32,128], index: 3, kind: output, shape index: {}]
  %s4 = sld [smem:[#allocation0]]
  $region53: #{nalu_forward.1} parent=0
    _
  %s6 = ssub.s32 1, %s4
  %s7 = scalar_select 0, %s6, %s4
  $region1: #{nalu_forward.1} parent=0
    #allocation2 [shape = 'u8[131072]{0}', space=vmem, size = 0x20000, scoped, tag = 'input window, operand 1, single buffered']
    #allocation3 [shape = 's32[2]{0}', space=sflag, size = 0x8, scoped, tag = 'scoped memory for nalu_forward.1']
    #allocation4 [shape = 'u8[131072]{0}', space=vmem, size = 0x20000, scoped, tag = 'input window, operand 2, single buffered']
    #allocation5 [shape = 's32[1]{0}', space=sflag, size = 0x4, scoped, tag = 'scoped memory for nalu_forward.1']
    %8 = vsyncpa [#allocation3], 0
    %9 = vsyncpa [#allocation5], 0
    loop: start=0, step=1, limit=4
    $region2: #{nalu_forward.1} parent=1 // loop_pre_header
      _
    $region3: #{nalu_forward.1} parent=1 // loop_header
      %s11 = sphi 0, %s15
      %p12 = scmp.ge.s32.totalorder %s11, 4
      %s21 = sphi 0, %s23
      %s24 = sphi 0, %s21
      %s25 = sphi 0, %s24
      %s41 = sphi 0, %s25
      %s45 = sphi 0, %s45
      %s47 = sphi 0, %s45
      %s48 = sphi 0, %s47
      %s62 = sphi 0, %s48
      %s66 = sphi 0, %s66
      %s68 = sphi 0, %s66
      %s69 = sphi 0, %s68
      %s83 = sphi 0, %s69
      %s89 = sphi 0, %s91
      %s92 = sphi 0, %s89
      %s93 = sphi 0, %s92
      %s109 = sphi 0, %s93
    $region4: #{nalu_forward.1} parent=1 // loop_header_branch
      %14 = sbr.rel (%p12) target = $region8
    $region5: #{nalu_forward.1} parent=1 // loop_body
      %s16 = ssub.s32 %s11, 1
      %s17 = ssub.s32 %s11, 2
      %s18 = sadd.s32 %s11, 1
      %s19 = ssub.s32 %s11, %s18
      %p20 = scmp.eq.s32.totalorder %s19, 0
      %s22 = sadd.s32 %s21, 1
      %s23 = scalar_select %p20, %s21, %s22
      %p26 = pneg %p20
      %p27 = scmp.eq.s32.totalorder %s11, 1
      %p28 = por %p26, %p27
      %p29 = scmp.ne.s32.totalorder %s21, %s24
      %p30 = scmp.eq.s32.totalorder %s11, 0
      %p31 = por %p29, %p30
      %p32 = scmp.ne.s32.totalorder %s21, %s24
      %p33 = scmp.eq.s32.totalorder %s16, 1
      %p34 = por %p32, %p33
      %p35 = scmp.ne.s32.totalorder %s24, %s25
      %p36 = scmp.eq.s32.totalorder %s16, 0
      %p37 = por %p35, %p36
      %p38 = scmp.ne.s32.totalorder %s24, %s25
      %p39 = scmp.eq.s32.totalorder %s17, 1
      %p40 = por %p38, %p39
      %p42 = scmp.ne.s32.totalorder %s25, %s41
      %p43 = scmp.eq.s32.totalorder %s17, 0
      %p44 = por %p42, %p43
      %s46 = sadd.s32 %s45, 1
      %p49 = scmp.eq.s32.totalorder %s11, 1
      %p50 = scmp.ne.s32.totalorder %s45, %s47
      %p51 = scmp.eq.s32.totalorder %s11, 0
      %p52 = por %p50, %p51
      %p53 = scmp.ne.s32.totalorder %s45, %s47
      %p54 = scmp.eq.s32.totalorder %s16, 1
      %p55 = por %p53, %p54
      %p56 = scmp.ne.s32.totalorder %s47, %s48
      %p57 = scmp.eq.s32.totalorder %s16, 0
      %p58 = por %p56, %p57
      %p59 = scmp.ne.s32.totalorder %s47, %s48
      %p60 = scmp.eq.s32.totalorder %s17, 1
      %p61 = por %p59, %p60
      %p63 = scmp.ne.s32.totalorder %s48, %s62
      %p64 = scmp.eq.s32.totalorder %s17, 0
      %p65 = por %p63, %p64
      %s67 = sadd.s32 %s66, 1
      %p70 = scmp.eq.s32.totalorder %s11, 1
      %p71 = scmp.ne.s32.totalorder %s66, %s68
      %p72 = scmp.eq.s32.totalorder %s11, 0
      %p73 = por %p71, %p72
      %p74 = scmp.ne.s32.totalorder %s66, %s68
      %p75 = scmp.eq.s32.totalorder %s16, 1
      %p76 = por %p74, %p75
      %p77 = scmp.ne.s32.totalorder %s68, %s69
      %p78 = scmp.eq.s32.totalorder %s16, 0
      %p79 = por %p77, %p78
      %p80 = scmp.ne.s32.totalorder %s68, %s69
      %p81 = scmp.eq.s32.totalorder %s17, 1
      %p82 = por %p80, %p81
      %p84 = scmp.ne.s32.totalorder %s69, %s83
      %p85 = scmp.eq.s32.totalorder %s17, 0
      %p86 = por %p84, %p85
      %s87 = ssub.s32 %s11, %s18
      %p88 = scmp.eq.s32.totalorder %s87, 0
      %s90 = sadd.s32 %s89, 1
      %s91 = scalar_select %p88, %s89, %s90
      %p94 = pneg %p88
      %p95 = scmp.eq.s32.totalorder %s11, 1
      %p96 = por %p94, %p95
      %p97 = scmp.ne.s32.totalorder %s89, %s92
      %p98 = scmp.eq.s32.totalorder %s11, 0
      %p99 = por %p97, %p98
      %p100 = scmp.ne.s32.totalorder %s89, %s92
      %p101 = scmp.eq.s32.totalorder %s16, 1
      %p102 = por %p100, %p101
      %p103 = scmp.ne.s32.totalorder %s92, %s93
      %p104 = scmp.eq.s32.totalorder %s16, 0
      %p105 = por %p103, %p104
      %p106 = scmp.ne.s32.totalorder %s92, %s93
      %p107 = scmp.eq.s32.totalorder %s17, 1
      %p108 = por %p106, %p107
      %p110 = scmp.ne.s32.totalorder %s93, %s109
      %p111 = scmp.eq.s32.totalorder %s17, 0
      %p112 = por %p110, %p111
      %p113 = scmp.le.s32.totalorder 1, %s11
      %p114 = scmp.lt.s32.totalorder %s11, 3
      %p115 = pnand %p113, %p114
      %p116 = pneg %p115
      // Predicated region
      $region9: #{nalu_forward.1} parent=5 // pred_check
        _
      $region10: #{nalu_forward.1} parent=5 // pred_check_branch
        %118 = sbr.rel (%p115) target = $region12
      $region11: #{nalu_forward.1} parent=5 // pred_region
        %s119 = ssub.s32 %s11, 1
        // Predicated region
        $region13: #{nalu_forward.1} parent=11 // pred_check
          %p120 = pneg %p58
        $region14: #{nalu_forward.1} parent=11 // pred_check_branch
          %122 = sbr.rel (%p120) target = $region16
        $region15: #{nalu_forward.1} parent=11 // pred_region
          %s124 = ssub.s32 4096, 4096
          %125 = vsyncadd [#allocation3], %s124
          %s126 = sshll.u32 [#allocation2], 4
          %s127 = int_to_ptr.vmem [resolvable:$true] %s126
          %132 = dma.hbm_to_vmem [thread:$0]  %s1, 4096, %s127, [#allocation3], 128, 128, 8
        $region16: #{nalu_forward.1} parent=11 // pred_fallthru
          _
        // Predicated region
        $region17: #{nalu_forward.1} parent=11 // pred_check
          %p133 = pneg %p79
        $region18: #{nalu_forward.1} parent=11 // pred_check_branch
          %135 = sbr.rel (%p133) target = $region20
        $region19: #{nalu_forward.1} parent=11 // pred_region
          %s137 = ssub.s32 4096, 4096
          %138 = vsyncadd [#allocation5], %s137
          %s139 = sshll.u32 [#allocation4], 4
          %s140 = int_to_ptr.vmem [resolvable:$true] %s139
          %145 = dma.hbm_to_vmem [thread:$0]  %s2, 4096, %s140, [#allocation5], 128, 128, 8
        $region20: #{nalu_forward.1} parent=11 // pred_fallthru
          _
      $region12: #{nalu_forward.1} parent=5 // pred_fallthru
        _
      %p146 = scmp.lt.s32.totalorder %s11, 2
      // Predicated region
      $region21: #{nalu_forward.1} parent=5 // pred_check
        %p147 = pneg %p146
      $region22: #{nalu_forward.1} parent=5 // pred_check_branch
        %149 = sbr.rel (%p147) target = $region24
      $region23: #{nalu_forward.1} parent=5 // pred_region
        // Predicated region
        $region25: #{nalu_forward.1} parent=23 // pred_check
          %p150 = pneg %p31
        $region26: #{nalu_forward.1} parent=23 // pred_check_branch
          %152 = sbr.rel (%p150) target = $region28
        $region27: #{nalu_forward.1} parent=23 // pred_region
          %s153 = smul.u32 2, %s11
          %p154 = scmp.lt.s32.totalorder %s153, 3
          %s155 = scalar_select %p154, %s153, 3
          %s156 = smul.addr %s155, 8
          %s157 = scalar_lea.vmem %s0, %s156
          %s158 = smul.u32 2, %s11
        $region28: #{nalu_forward.1} parent=23 // pred_fallthru
          _
      $region24: #{nalu_forward.1} parent=5 // pred_fallthru
        _
      %p159 = scmp.le.s32.totalorder 1, %s11
      %p160 = scmp.lt.s32.totalorder %s11, 3
      %p161 = pnand %p159, %p160
      %p162 = pneg %p161
      // Predicated region
      $region29: #{nalu_forward.1} parent=5 // pred_check
        _
      $region30: #{nalu_forward.1} parent=5 // pred_check_branch
        %164 = sbr.rel (%p161) target = $region32
      $region31: #{nalu_forward.1} parent=5 // pred_region
        %s165 = ssub.s32 %s11, 1
        // Predicated region
        $region33: #{nalu_forward.1} parent=31 // pred_check
          %p166 = pneg %p58
        $region34: #{nalu_forward.1} parent=31 // pred_check_branch
          %168 = sbr.rel (%p166) target = $region36
        $region35: #{nalu_forward.1} parent=31 // pred_region
          %169 = dma.done [#allocation3], 4096
        $region36: #{nalu_forward.1} parent=31 // pred_fallthru
          _
        // Predicated region
        $region37: #{nalu_forward.1} parent=31 // pred_check
          %p170 = pneg %p79
        $region38: #{nalu_forward.1} parent=31 // pred_check_branch
          %172 = sbr.rel (%p170) target = $region40
        $region39: #{nalu_forward.1} parent=31 // pred_region
          %173 = dma.done [#allocation5], 4096
        $region40: #{nalu_forward.1} parent=31 // pred_fallthru
          _
        %s174 = smul.u32 2, %s16
        %p175 = scmp.lt.s32.totalorder %s174, 3
        %s176 = scalar_select %p175, %s174, 3
        %s177 = smul.addr %s176, 8
        %s178 = scalar_lea.vmem %s0, %s177
        %p179 = pneg %p37
        %p180 = pneg %p34
        %p181 = pneg %p58
        %p182 = pneg %p55
        %p183 = pneg %p79
        %p184 = pneg %p76
        %p185 = pneg %p105
        %p186 = pneg %p102
        %s187 = smul.u32 2, %s16
        %p188 = scmp.lt.s32.totalorder %s187, 3
        %s189 = scalar_select %p188, %s187, 3
        %s190 = smul.addr %s189, 8
        %s191 = scalar_lea.vmem %s3, %s190
        %s192 = smul.u32 2, %s16
        %p193 = scmp.lt.s32.totalorder %s192, 3
        %s194 = scalar_select %p193, %s192, 3
        %s195 = smul.addr %s194, 8
        %s196 = scalar_lea.vmem %s0, %s195
        %s197 = smul.u32 2, %s16
        %s198 = smul.u32 2, %s16
        %p199 = scmp.lt.s32.totalorder %s198, 3
        %s200 = scalar_select %p199, %s198, 3
        %s201 = smul.addr %s200, 8
        %s202 = scalar_lea.vmem %s3, %s201
        %s203 = smul.u32 2, %s16
        %v205 = vld [vmem:[%s196] sm:$0xff]
        %v206 = vld [vmem:[%s196 + $0x8] sm:$0xff]
        %v207 = vld [vmem:[#allocation2] sm:$0xff]
        %v208 = vld [vmem:[#allocation2 + $0x8] sm:$0xff]
        %v209 = vld [vmem:[#allocation2 + $0x10] sm:$0xff]
        %v210 = vld [vmem:[#allocation2 + $0x18] sm:$0xff]
        %v211 = vld [vmem:[#allocation2 + $0x20] sm:$0xff]
        %v212 = vld [vmem:[#allocation2 + $0x28] sm:$0xff]
        %v213 = vld [vmem:[#allocation2 + $0x30] sm:$0xff]
        %v214 = vld [vmem:[#allocation2 + $0x38] sm:$0xff]
        %v215 = vld [vmem:[#allocation2 + $0x40] sm:$0xff]
        %v216 = vld [vmem:[#allocation2 + $0x48] sm:$0xff]
        %v217 = vld [vmem:[#allocation2 + $0x50] sm:$0xff]
        %v218 = vld [vmem:[#allocation2 + $0x58] sm:$0xff]
        %v219 = vld [vmem:[#allocation2 + $0x60] sm:$0xff]
        %v220 = vld [vmem:[#allocation2 + $0x68] sm:$0xff]
        %v221 = vld [vmem:[#allocation2 + $0x70] sm:$0xff]
        %v222 = vld [vmem:[#allocation2 + $0x78] sm:$0xff]
        %v223 = vld [vmem:[#allocation4] sm:$0xff]
        %v224 = vld [vmem:[#allocation4 + $0x8] sm:$0xff]
        %v225 = vld [vmem:[#allocation4 + $0x10] sm:$0xff]
        %v226 = vld [vmem:[#allocation4 + $0x18] sm:$0xff]
        %v227 = vld [vmem:[#allocation4 + $0x20] sm:$0xff]
        %v228 = vld [vmem:[#allocation4 + $0x28] sm:$0xff]
        %v229 = vld [vmem:[#allocation4 + $0x30] sm:$0xff]
        %v230 = vld [vmem:[#allocation4 + $0x38] sm:$0xff]
        %v231 = vld [vmem:[#allocation4 + $0x40] sm:$0xff]
        %v232 = vld [vmem:[#allocation4 + $0x48] sm:$0xff]
        %v233 = vld [vmem:[#allocation4 + $0x50] sm:$0xff]
        %v234 = vld [vmem:[#allocation4 + $0x58] sm:$0xff]
        %v235 = vld [vmem:[#allocation4 + $0x60] sm:$0xff]
        %v236 = vld [vmem:[#allocation4 + $0x68] sm:$0xff]
        %v237 = vld [vmem:[#allocation4 + $0x70] sm:$0xff]
        %v238 = vld [vmem:[#allocation4 + $0x78] sm:$0xff]
        %v239 = vpack.c.bf16 %v206, %v205
        %v256 = vunpack.c.l.b16 %v207
        %v257 = vunpack.c.h.b16 %v207
        %v258 = vunpack.c.l.b16 %v208
        %v259 = vunpack.c.h.b16 %v208
        %v260 = vunpack.c.l.b16 %v209
        %v261 = vunpack.c.h.b16 %v209
        %v262 = vunpack.c.l.b16 %v210
        %v263 = vunpack.c.h.b16 %v210
        %v264 = vunpack.c.l.b16 %v211
        %v265 = vunpack.c.h.b16 %v211
        %v266 = vunpack.c.l.b16 %v212
        %v267 = vunpack.c.h.b16 %v212
        %v268 = vunpack.c.l.b16 %v213
        %v269 = vunpack.c.h.b16 %v213
        %v270 = vunpack.c.l.b16 %v214
        %v271 = vunpack.c.h.b16 %v214
        %v272 = vunpack.c.l.b16 %v215
        %v273 = vunpack.c.h.b16 %v215
        %v274 = vunpack.c.l.b16 %v216
        %v275 = vunpack.c.h.b16 %v216
        %v276 = vunpack.c.l.b16 %v217
        %v277 = vunpack.c.h.b16 %v217
        %v278 = vunpack.c.l.b16 %v218
        %v279 = vunpack.c.h.b16 %v218
        %v280 = vunpack.c.l.b16 %v219
        %v281 = vunpack.c.h.b16 %v219
        %v282 = vunpack.c.l.b16 %v220
        %v283 = vunpack.c.h.b16 %v220
        %v284 = vunpack.c.l.b16 %v221
        %v285 = vunpack.c.h.b16 %v221
        %v286 = vunpack.c.l.b16 %v222
        %v287 = vunpack.c.h.b16 %v222
        %v288 = vpack.c.b16 %v258, %v256
        %v289 = vpack.c.b16 %v259, %v257
        %v290 = vpack.c.b16 %v262, %v260
        %v291 = vpack.c.b16 %v263, %v261
        %v292 = vpack.c.b16 %v266, %v264
        %v293 = vpack.c.b16 %v267, %v265
        %v294 = vpack.c.b16 %v270, %v268
        %v295 = vpack.c.b16 %v271, %v269
        %v296 = vpack.c.b16 %v274, %v272
        %v297 = vpack.c.b16 %v275, %v273
        %v298 = vpack.c.b16 %v278, %v276
        %v299 = vpack.c.b16 %v279, %v277
        %v300 = vpack.c.b16 %v282, %v280
        %v301 = vpack.c.b16 %v283, %v281
        %v302 = vpack.c.b16 %v286, %v284
        %v303 = vpack.c.b16 %v287, %v285
        %320 = vmatprep.subr.bf16.mxu0 %v303
        %321 = vmatpush1.bf16.msra.mxu0 %v302
        %322 = vmatprep.subr.bf16.mxu0 %v301
        %323 = vmatpush1.bf16.msra.mxu0 %v300
        %324 = vmatprep.subr.bf16.mxu0 %v299
        %325 = vmatpush1.bf16.msra.mxu0 %v298
        %326 = vmatprep.subr.bf16.mxu0 %v297
        %327 = vmatpush1.bf16.msra.mxu0 %v296
        %328 = vmatprep.subr.bf16.mxu0 %v295
        %329 = vmatpush1.bf16.msra.mxu0 %v294
        %330 = vmatprep.subr.bf16.mxu0 %v293
        %331 = vmatpush1.bf16.msra.mxu0 %v292
        %332 = vmatprep.subr.bf16.mxu0 %v291
        %333 = vmatpush1.bf16.msra.mxu0 %v290
        %334 = vmatprep.subr.bf16.mxu0 %v289
        %335 = vmatpush1.bf16.msra.mxu0 %v288
        %336 = vmatprep.subr.bf16.mxu0 0
        %337 = vmatpush2.bf16.msra.mxu0 0
        %338 = vmatprep.subr.bf16.mxu0 0
        %339 = vmatpush2.bf16.msra.mxu0 0
        %340 = vmatprep.subr.bf16.mxu0 0
        %341 = vmatpush2.bf16.msra.mxu0 0
        %342 = vmatprep.subr.bf16.mxu0 0
        %343 = vmatpush2.bf16.msra.mxu0 0
        %344 = vmatprep.subr.bf16.mxu0 0
        %345 = vmatpush2.bf16.msra.mxu0 0
        %346 = vmatprep.subr.bf16.mxu0 0
        %347 = vmatpush2.bf16.msra.mxu0 0
        %348 = vmatprep.subr.bf16.mxu0 0
        %349 = vmatpush2.bf16.msra.mxu0 0
        %350 = vmatprep.subr.bf16.mxu0 0
        %351 = vmatpush2.bf16.msra.mxu0 0
        %352 = vmatprep.mubr.bf16.mxu0 0
        %353 = vmatmul.mubr.bf16.gmra.mxu0 %v239
        %v354 = vpop.f32.mrf.mxu0
        %v355 = vadd.f32 0.0, %v354
        %v356 = vpop.f32.mrf.mxu0
        %v357 = vadd.f32 0.0, %v356
        %v358 = vpop.f32.mrf.mxu0
        %v359 = vadd.f32 0.0, %v358
        %v360 = vpop.f32.mrf.mxu0
        %v361 = vadd.f32 0.0, %v360
        %362 = vdwg.mxu0
        %v363 = vxor.u32 %v357, 2147483648
        %v364 = vxor.u32 %v361, 2147483648
        %v365 = vmul.f32 %v363, 1.442695
        %v366 = vpow.pop %v365
        %v367 = vmul.f32 %v364, 1.442695
        %v368 = vpow.pop %v367
        %v369 = vadd.f32 %v366, 1.0
        %v370 = vadd.f32 %v368, 1.0
        %v371 = vrcp.pop %v369
        %v372 = vmul.f32 1.0, %v371
        %v373 = vrcp.pop %v370
        %v374 = vmul.f32 1.0, %v373
        %v375 = vand.u32 2147483647, %v205
        %v376 = vand.u32 2147483647, %v206
        %v377 = vadd.f32 %v375, 1e-10
        %v378 = vadd.f32 %v376, 1e-10
        %v379 = vlog2.pop %v377
        %v380 = vmul.f32 %v379, 0.6931472
        %v381 = vlog2.pop %v378
        %v382 = vmul.f32 %v381, 0.6931472
        %383 = vmatprep.subr.mxu0 0.0
        %384 = vmatpush1.msra.mxu0 %v238
        %385 = vmatprep.subr.mxu0 0.0
        %386 = vmatpush1.msra.mxu0 %v237
        %387 = vmatprep.subr.mxu0 0.0
        %388 = vmatpush1.msra.mxu0 %v236
        %389 = vmatprep.subr.mxu0 0.0
        %390 = vmatpush1.msra.mxu0 %v235
        %391 = vmatprep.subr.mxu0 0.0
        %392 = vmatpush1.msra.mxu0 %v234
        %393 = vmatprep.subr.mxu0 0.0
        %394 = vmatpush1.msra.mxu0 %v233
        %395 = vmatprep.subr.mxu0 0.0
        %396 = vmatpush1.msra.mxu0 %v232
        %397 = vmatprep.subr.mxu0 0.0
        %398 = vmatpush1.msra.mxu0 %v231
        %399 = vmatprep.subr.mxu0 0.0
        %400 = vmatpush1.msra.mxu0 %v230
        %401 = vmatprep.subr.mxu0 0.0
        %402 = vmatpush1.msra.mxu0 %v229
        %403 = vmatprep.subr.mxu0 0.0
        %404 = vmatpush1.msra.mxu0 %v228
        %405 = vmatprep.subr.mxu0 0.0
        %406 = vmatpush1.msra.mxu0 %v227
        %407 = vmatprep.subr.mxu0 0.0
        %408 = vmatpush1.msra.mxu0 %v226
        %409 = vmatprep.subr.mxu0 0.0
        %410 = vmatpush1.msra.mxu0 %v225
        %411 = vmatprep.subr.mxu0 0.0
        %412 = vmatpush1.msra.mxu0 %v224
        %413 = vmatprep.subr.mxu0 0.0
        %414 = vmatpush1.msra.mxu0 %v223
        %415 = vmatprep.subr.mxu0 0.0
        %416 = vmatpush2.msra.mxu0 0.0
        %417 = vmatprep.subr.mxu0 0.0
        %418 = vmatpush2.msra.mxu0 0.0
        %419 = vmatprep.subr.mxu0 0.0
        %420 = vmatpush2.msra.mxu0 0.0
        %421 = vmatprep.subr.mxu0 0.0
        %422 = vmatpush2.msra.mxu0 0.0
        %423 = vmatprep.subr.mxu0 0.0
        %424 = vmatpush2.msra.mxu0 0.0
        %425 = vmatprep.subr.mxu0 0.0
        %426 = vmatpush2.msra.mxu0 0.0
        %427 = vmatprep.subr.mxu0 0.0
        %428 = vmatpush2.msra.mxu0 0.0
        %429 = vmatprep.subr.mxu0 0.0
        %430 = vmatpush2.msra.mxu0 0.0
        %431 = vmatprep.subr.mxu0 0.0
        %432 = vmatpush2.msra.mxu0 0.0
        %433 = vmatprep.subr.mxu0 0.0
        %434 = vmatpush2.msra.mxu0 0.0
        %435 = vmatprep.subr.mxu0 0.0
        %436 = vmatpush2.msra.mxu0 0.0
        %437 = vmatprep.subr.mxu0 0.0
        %438 = vmatpush2.msra.mxu0 0.0
        %439 = vmatprep.subr.mxu0 0.0
        %440 = vmatpush2.msra.mxu0 0.0
        %441 = vmatprep.subr.mxu0 0.0
        %442 = vmatpush2.msra.mxu0 0.0
        %443 = vmatprep.subr.mxu0 0.0
        %444 = vmatpush2.msra.mxu0 0.0
        %445 = vmatprep.subr.mxu0 0.0
        %446 = vmatpush2.msra.mxu0 0.0
        %447 = vmatprep.mubr.f32.mxu0 0.0
        %448 = vmatmul.mubr.f32.gmra.mxu0 %v380
        %v449 = vpop.f32.mrf.mxu0
        %v450 = vadd.f32 0.0, %v449
        %v451 = vpop.f32.mrf.mxu0
        %452 = vmatprep.mubr.f32.mxu0 0.0
        %453 = vmatmul.mubr.f32.gmra.mxu0 %v382
        %v454 = vpop.f32.mrf.mxu0
        %v455 = vadd.f32 0.0, %v454
        %v456 = vpop.f32.mrf.mxu0
        %457 = vdwg.mxu0
        %v458 = vmul.f32 %v450, 1.442695
        %v459 = vpow.pop %v458
        %v460 = vmul.f32 %v455, 1.442695
        %v461 = vpow.pop %v460
        %v462 = vmul.f32 %v372, %v355
        %v463 = vmul.f32 %v374, %v359
        %v464 = vsub.f32 1.0, %v372
        %v465 = vsub.f32 1.0, %v374
        %v466 = vmul.f32 %v464, %v459
        %v467 = vmul.f32 %v465, %v461
        %v468 = vadd.f32 %v462, %v466
        %v469 = vadd.f32 %v463, %v467
        %s470 = scalar_lea.vmem [#allocation2], 128
        %v471 = vld [vmem:[%s470] sm:$0xff]
        %v472 = vld [vmem:[%s470 + $0x8] sm:$0xff]
        %v473 = vld [vmem:[%s470 + $0x10] sm:$0xff]
        %v474 = vld [vmem:[%s470 + $0x18] sm:$0xff]
        %v475 = vld [vmem:[%s470 + $0x20] sm:$0xff]
        %v476 = vld [vmem:[%s470 + $0x28] sm:$0xff]
        %v477 = vld [vmem:[%s470 + $0x30] sm:$0xff]
        %v478 = vld [vmem:[%s470 + $0x38] sm:$0xff]
        %v479 = vld [vmem:[%s470 + $0x40] sm:$0xff]
        %v480 = vld [vmem:[%s470 + $0x48] sm:$0xff]
        %v481 = vld [vmem:[%s470 + $0x50] sm:$0xff]
        %v482 = vld [vmem:[%s470 + $0x58] sm:$0xff]
        %v483 = vld [vmem:[%s470 + $0x60] sm:$0xff]
        %v484 = vld [vmem:[%s470 + $0x68] sm:$0xff]
        %v485 = vld [vmem:[%s470 + $0x70] sm:$0xff]
        %v486 = vld [vmem:[%s470 + $0x78] sm:$0xff]
        %s487 = scalar_lea.vmem [#allocation4], 128
        %v488 = vld [vmem:[%s487] sm:$0xff]
        %v489 = vld [vmem:[%s487 + $0x8] sm:$0xff]
        %v490 = vld [vmem:[%s487 + $0x10] sm:$0xff]
        %v491 = vld [vmem:[%s487 + $0x18] sm:$0xff]
        %v492 = vld [vmem:[%s487 + $0x20] sm:$0xff]
        %v493 = vld [vmem:[%s487 + $0x28] sm:$0xff]
        %v494 = vld [vmem:[%s487 + $0x30] sm:$0xff]
        %v495 = vld [vmem:[%s487 + $0x38] sm:$0xff]
        %v496 = vld [vmem:[%s487 + $0x40] sm:$0xff]
        %v497 = vld [vmem:[%s487 + $0x48] sm:$0xff]
        %v498 = vld [vmem:[%s487 + $0x50] sm:$0xff]
        %v499 = vld [vmem:[%s487 + $0x58] sm:$0xff]
        %v500 = vld [vmem:[%s487 + $0x60] sm:$0xff]
        %v501 = vld [vmem:[%s487 + $0x68] sm:$0xff]
        %v502 = vld [vmem:[%s487 + $0x70] sm:$0xff]
        %v503 = vld [vmem:[%s487 + $0x78] sm:$0xff]
        %v504 = vpack.c.bf16 %v469, %v468
        %v521 = vunpack.c.l.b16 %v471
        %v522 = vunpack.c.h.b16 %v471
        %v523 = vunpack.c.l.b16 %v472
        %v524 = vunpack.c.h.b16 %v472
        %v525 = vunpack.c.l.b16 %v473
        %v526 = vunpack.c.h.b16 %v473
        %v527 = vunpack.c.l.b16 %v474
        %v528 = vunpack.c.h.b16 %v474
        %v529 = vunpack.c.l.b16 %v475
        %v530 = vunpack.c.h.b16 %v475
        %v531 = vunpack.c.l.b16 %v476
        %v532 = vunpack.c.h.b16 %v476
        %v533 = vunpack.c.l.b16 %v477
        %v534 = vunpack.c.h.b16 %v477
        %v535 = vunpack.c.l.b16 %v478
        %v536 = vunpack.c.h.b16 %v478
        %v537 = vunpack.c.l.b16 %v479
        %v538 = vunpack.c.h.b16 %v479
        %v539 = vunpack.c.l.b16 %v480
        %v540 = vunpack.c.h.b16 %v480
        %v541 = vunpack.c.l.b16 %v481
        %v542 = vunpack.c.h.b16 %v481
        %v543 = vunpack.c.l.b16 %v482
        %v544 = vunpack.c.h.b16 %v482
        %v545 = vunpack.c.l.b16 %v483
        %v546 = vunpack.c.h.b16 %v483
        %v547 = vunpack.c.l.b16 %v484
        %v548 = vunpack.c.h.b16 %v484
        %v549 = vunpack.c.l.b16 %v485
        %v550 = vunpack.c.h.b16 %v485
        %v551 = vunpack.c.l.b16 %v486
        %v552 = vunpack.c.h.b16 %v486
        %v553 = vpack.c.b16 %v523, %v521
        %v554 = vpack.c.b16 %v524, %v522
        %v555 = vpack.c.b16 %v527, %v525
        %v556 = vpack.c.b16 %v528, %v526
        %v557 = vpack.c.b16 %v531, %v529
        %v558 = vpack.c.b16 %v532, %v530
        %v559 = vpack.c.b16 %v535, %v533
        %v560 = vpack.c.b16 %v536, %v534
        %v561 = vpack.c.b16 %v539, %v537
        %v562 = vpack.c.b16 %v540, %v538
        %v563 = vpack.c.b16 %v543, %v541
        %v564 = vpack.c.b16 %v544, %v542
        %v565 = vpack.c.b16 %v547, %v545
        %v566 = vpack.c.b16 %v548, %v546
        %v567 = vpack.c.b16 %v551, %v549
        %v568 = vpack.c.b16 %v552, %v550
        %585 = vmatprep.subr.bf16.mxu0 %v568
        %586 = vmatpush1.bf16.msra.mxu0 %v567
        %587 = vmatprep.subr.bf16.mxu0 %v566
        %588 = vmatpush1.bf16.msra.mxu0 %v565
        %589 = vmatprep.subr.bf16.mxu0 %v564
        %590 = vmatpush1.bf16.msra.mxu0 %v563
        %591 = vmatprep.subr.bf16.mxu0 %v562
        %592 = vmatpush1.bf16.msra.mxu0 %v561
        %593 = vmatprep.subr.bf16.mxu0 %v560
        %594 = vmatpush1.bf16.msra.mxu0 %v559
        %595 = vmatprep.subr.bf16.mxu0 %v558
        %596 = vmatpush1.bf16.msra.mxu0 %v557
        %597 = vmatprep.subr.bf16.mxu0 %v556
        %598 = vmatpush1.bf16.msra.mxu0 %v555
        %599 = vmatprep.subr.bf16.mxu0 %v554
        %600 = vmatpush1.bf16.msra.mxu0 %v553
        %601 = vmatprep.subr.bf16.mxu0 0
        %602 = vmatpush2.bf16.msra.mxu0 0
        %603 = vmatprep.subr.bf16.mxu0 0
        %604 = vmatpush2.bf16.msra.mxu0 0
        %605 = vmatprep.subr.bf16.mxu0 0
        %606 = vmatpush2.bf16.msra.mxu0 0
        %607 = vmatprep.subr.bf16.mxu0 0
        %608 = vmatpush2.bf16.msra.mxu0 0
        %609 = vmatprep.subr.bf16.mxu0 0
        %610 = vmatpush2.bf16.msra.mxu0 0
        %611 = vmatprep.subr.bf16.mxu0 0
        %612 = vmatpush2.bf16.msra.mxu0 0
        %613 = vmatprep.subr.bf16.mxu0 0
        %614 = vmatpush2.bf16.msra.mxu0 0
        %615 = vmatprep.subr.bf16.mxu0 0
        %616 = vmatpush2.bf16.msra.mxu0 0
        %617 = vmatprep.mubr.bf16.mxu0 0
        %618 = vmatmul.mubr.bf16.gmra.mxu0 %v504
        %v619 = vpop.f32.mrf.mxu0
        %v620 = vadd.f32 0.0, %v619
        %v621 = vpop.f32.mrf.mxu0
        %v622 = vadd.f32 0.0, %v621
        %v623 = vpop.f32.mrf.mxu0
        %v624 = vadd.f32 0.0, %v623
        %v625 = vpop.f32.mrf.mxu0
        %v626 = vadd.f32 0.0, %v625
        %627 = vdwg.mxu0
        %v628 = vxor.u32 %v622, 2147483648
        %v629 = vxor.u32 %v626, 2147483648
        %v630 = vmul.f32 %v628, 1.442695
        %v631 = vpow.pop %v630
        %v632 = vmul.f32 %v629, 1.442695
        %v633 = vpow.pop %v632
        %v634 = vadd.f32 %v631, 1.0
        %v635 = vadd.f32 %v633, 1.0
        %v636 = vrcp.pop %v634
        %v637 = vmul.f32 1.0, %v636
        %v638 = vrcp.pop %v635
        %v639 = vmul.f32 1.0, %v638
        %v640 = vand.u32 2147483647, %v468
        %v641 = vand.u32 2147483647, %v469
        %v642 = vadd.f32 %v640, 1e-10
        %v643 = vadd.f32 %v641, 1e-10
        %v644 = vlog2.pop %v642
        %v645 = vmul.f32 %v644, 0.6931472
        %v646 = vlog2.pop %v643
        %v647 = vmul.f32 %v646, 0.6931472
        %648 = vmatprep.subr.mxu0 0.0
        %649 = vmatpush1.msra.mxu0 %v503
        %650 = vmatprep.subr.mxu0 0.0
        %651 = vmatpush1.msra.mxu0 %v502
        %652 = vmatprep.subr.mxu0 0.0
        %653 = vmatpush1.msra.mxu0 %v501
        %654 = vmatprep.subr.mxu0 0.0
        %655 = vmatpush1.msra.mxu0 %v500
        %656 = vmatprep.subr.mxu0 0.0
        %657 = vmatpush1.msra.mxu0 %v499
        %658 = vmatprep.subr.mxu0 0.0
        %659 = vmatpush1.msra.mxu0 %v498
        %660 = vmatprep.subr.mxu0 0.0
        %661 = vmatpush1.msra.mxu0 %v497
        %662 = vmatprep.subr.mxu0 0.0
        %663 = vmatpush1.msra.mxu0 %v496
        %664 = vmatprep.subr.mxu0 0.0
        %665 = vmatpush1.msra.mxu0 %v495
        %666 = vmatprep.subr.mxu0 0.0
        %667 = vmatpush1.msra.mxu0 %v494
        %668 = vmatprep.subr.mxu0 0.0
        %669 = vmatpush1.msra.mxu0 %v493
        %670 = vmatprep.subr.mxu0 0.0
        %671 = vmatpush1.msra.mxu0 %v492
        %672 = vmatprep.subr.mxu0 0.0
        %673 = vmatpush1.msra.mxu0 %v491
        %674 = vmatprep.subr.mxu0 0.0
        %675 = vmatpush1.msra.mxu0 %v490
        %676 = vmatprep.subr.mxu0 0.0
        %677 = vmatpush1.msra.mxu0 %v489
        %678 = vmatprep.subr.mxu0 0.0
        %679 = vmatpush1.msra.mxu0 %v488
        %680 = vmatprep.subr.mxu0 0.0
        %681 = vmatpush2.msra.mxu0 0.0
        %682 = vmatprep.subr.mxu0 0.0
        %683 = vmatpush2.msra.mxu0 0.0
        %684 = vmatprep.subr.mxu0 0.0
        %685 = vmatpush2.msra.mxu0 0.0
        %686 = vmatprep.subr.mxu0 0.0
        %687 = vmatpush2.msra.mxu0 0.0
        %688 = vmatprep.subr.mxu0 0.0
        %689 = vmatpush2.msra.mxu0 0.0
        %690 = vmatprep.subr.mxu0 0.0
        %691 = vmatpush2.msra.mxu0 0.0
        %692 = vmatprep.subr.mxu0 0.0
        %693 = vmatpush2.msra.mxu0 0.0
        %694 = vmatprep.subr.mxu0 0.0
        %695 = vmatpush2.msra.mxu0 0.0
        %696 = vmatprep.subr.mxu0 0.0
        %697 = vmatpush2.msra.mxu0 0.0
        %698 = vmatprep.subr.mxu0 0.0
        %699 = vmatpush2.msra.mxu0 0.0
        %700 = vmatprep.subr.mxu0 0.0
        %701 = vmatpush2.msra.mxu0 0.0
        %702 = vmatprep.subr.mxu0 0.0
        %703 = vmatpush2.msra.mxu0 0.0
        %704 = vmatprep.subr.mxu0 0.0
        %705 = vmatpush2.msra.mxu0 0.0
        %706 = vmatprep.subr.mxu0 0.0
        %707 = vmatpush2.msra.mxu0 0.0
        %708 = vmatprep.subr.mxu0 0.0
        %709 = vmatpush2.msra.mxu0 0.0
        %710 = vmatprep.subr.mxu0 0.0
        %711 = vmatpush2.msra.mxu0 0.0
        %712 = vmatprep.mubr.f32.mxu0 0.0
        %713 = vmatmul.mubr.f32.gmra.mxu0 %v645
        %v714 = vpop.f32.mrf.mxu0
        %v715 = vadd.f32 0.0, %v714
        %v716 = vpop.f32.mrf.mxu0
        %717 = vmatprep.mubr.f32.mxu0 0.0
        %718 = vmatmul.mubr.f32.gmra.mxu0 %v647
        %v719 = vpop.f32.mrf.mxu0
        %v720 = vadd.f32 0.0, %v719
        %v721 = vpop.f32.mrf.mxu0
        %722 = vdwg.mxu0
        %v723 = vmul.f32 %v715, 1.442695
        %v724 = vpow.pop %v723
        %v725 = vmul.f32 %v720, 1.442695
        %v726 = vpow.pop %v725
        %v727 = vmul.f32 %v637, %v620
        %v728 = vmul.f32 %v639, %v624
        %v729 = vsub.f32 1.0, %v637
        %v730 = vsub.f32 1.0, %v639
        %v731 = vmul.f32 %v729, %v724
        %v732 = vmul.f32 %v730, %v726
        %v733 = vadd.f32 %v727, %v731
        %v734 = vadd.f32 %v728, %v732
        %735 = vst [vmem:[%s202] sm:$0xff] %v733
        %736 = vst [vmem:[%s202 + $0x8] sm:$0xff] %v734
        %s737 = smul.u32 2, %s16
        %p738 = scmp.lt.s32.totalorder %s737, 3
        %s739 = scalar_select %p738, %s737, 3
        %s740 = smul.addr %s739, 8
        %s741 = scalar_lea.vmem %s3, %s740
        // Predicated region
        $region41: #{nalu_forward.1} parent=31 // pred_check
          %p742 = pneg %p102
        $region42: #{nalu_forward.1} parent=31 // pred_check_branch
          %744 = sbr.rel (%p742) target = $region44
        $region43: #{nalu_forward.1} parent=31 // pred_region
          %s745 = smul.u32 2, %s16
        $region44: #{nalu_forward.1} parent=31 // pred_fallthru
          _
      $region32: #{nalu_forward.1} parent=5 // pred_fallthru
        _
      %p746 = scmp.le.s32.totalorder 2, %s11
      // Predicated region
      $region45: #{nalu_forward.1} parent=5 // pred_check
        %p747 = pneg %p746
      $region46: #{nalu_forward.1} parent=5 // pred_check_branch
        %749 = sbr.rel (%p747) target = $region48
      $region47: #{nalu_forward.1} parent=5 // pred_region
        %s750 = ssub.s32 %s11, 2
        // Predicated region
        $region49: #{nalu_forward.1} parent=47 // pred_check
          %p751 = pneg %p108
        $region50: #{nalu_forward.1} parent=47 // pred_check_branch
          %753 = sbr.rel (%p751) target = $region52
        $region51: #{nalu_forward.1} parent=47 // pred_region
          %s754 = smul.u32 2, %s17
          %p755 = scmp.lt.s32.totalorder %s754, 3
          %s756 = scalar_select %p755, %s754, 3
          %s757 = smul.addr %s756, 8
          %s758 = scalar_lea.vmem %s3, %s757
        $region52: #{nalu_forward.1} parent=47 // pred_fallthru
          _
      $region48: #{nalu_forward.1} parent=5 // pred_fallthru
        _
    $region6: #{nalu_forward.1} parent=1 // loop_footer
      %s15 = sadd.s32 1, %s11
    $region7: #{nalu_forward.1} parent=1 // loop_footer_branch
      %10 = sbr.rel target = $region3
    $region8: #{nalu_forward.1} parent=1 // loop_exit
      _
    %759 = vsyncpa [#allocation3], 1
    %s760 = scalar_lea.sflag [#allocation3], 1
    %761 = vsyncpa %s760, 1
    %762 = vsyncpa [#allocation5], 1

</llo_original>
